<compile_context>
chip_gen: v6e
topology: v6e:2x2x1
jax: 0.10.0
libtpu: 0.0.40
codegen_flags: <defaults>
</compile_context>

<pallas_src>
import jax
import jax.numpy as jnp
from jax.experimental import pallas as pl
from jax.experimental.pallas import tpu as pltpu


_VMEM = pl.BlockSpec(memory_space=pltpu.MemorySpace.VMEM)
_LANE = 128
# Exact reciprocal keeps the 1e-5 reference check; flip to True in production
# builds (the EUP slot is otherwise idle here) -- review item.
_APPROX_RECIPROCAL = False


def _compiler_params(*arrays, scratch_bytes=0):
    """vmem_limit_bytes sized to the resident set with headroom (review item)."""
    resident = sum(int(a.size) * a.dtype.itemsize for a in arrays) + scratch_bytes
    limit = int(min(max(2 * resident + (8 << 20), 16 << 20), 64 << 20))
    return pltpu.CompilerParams(vmem_limit_bytes=limit)


# ---------------------------------------------------------------------------
# Shared single-step recurrence math (values already resident in VMEM/vregs).
# Returns (h_new, attn); the vocab projection is applied by the caller so the
# fused kernel can batch it over time.
# ---------------------------------------------------------------------------
def _recurrence_step(embs, h, sents, enc_proj,
                     w1, v, lin_we, lin_wc, lin_b,
                     w_ir, w_iz, w_in, w_hr, w_hz, w_hn,
                     b_r, b_z, b_in, b_hn):
    f32 = jnp.float32

    # --- additive attention -------------------------------------------------
    # enc_proj = sents @ W2 + b1 + b2 is precomputed (step-invariant).
    p1 = jnp.dot(h, w1, preferred_element_type=f32)                  # (1, A)
    t = jnp.tanh(p1 + enc_proj)                                      # (S, A)
    # scores[0, s] = sum_a v[0, a] * t[s, a]  -> lane-dense (1, S) row.
    # TODO(synk): at production S, A pre-transpose v to (A, 1) and compute a
    # column score (t @ v_col) to avoid re-transposing the fresh (S, A) tile
    # each step; at these toy shapes t is a single vreg so it's free.
    scores = jax.lax.dot_general(
        v, t, (((1,), (1,)), ((), ())), preferred_element_type=f32)  # (1, S)
    m = jnp.max(scores, axis=-1, keepdims=True)
    e = jnp.exp(scores - m)
    denom = jnp.sum(e, axis=-1, keepdims=True)
    attn = e * pl.reciprocal(denom, approx=_APPROX_RECIPROCAL)       # (1, S)

    # --- context vector: (1, S) @ (S, enc) on the MXU ------------------------
    ctx = jnp.dot(attn, sents, preferred_element_type=f32)           # (1, enc)

    # --- relu(lin(cat(embs, ctx))): concat realised as split matmul ----------
    x = jnp.maximum(
        jnp.dot(embs, lin_we, preferred_element_type=f32)
        + jnp.dot(ctx, lin_wc, preferred_element_type=f32)
        + lin_b, 0.0)                                                # (1, H)

    # --- one GRU step (torch nn.GRU semantics), per-gate matmuls -------------
    # TODO(synk): at production H (multiple of 128) re-fuse to one x@wih and
    # one h@whh (1, 3H) matmul with lane-aligned gate slices (review item).
    r = jax.nn.sigmoid(jnp.dot(x, w_ir, preferred_element_type=f32)
                       + jnp.dot(h, w_hr, preferred_element_type=f32) + b_r)
    z = jax.nn.sigmoid(jnp.dot(x, w_iz, preferred_element_type=f32)
                       + jnp.dot(h, w_hz, preferred_element_type=f32) + b_z)
    n = jnp.tanh(jnp.dot(x, w_in, preferred_element_type=f32) + b_in
                 + r * (jnp.dot(h, w_hn, preferred_element_type=f32) + b_hn))
    h_new = (1.0 - z) * n + z * h                                    # (1, H)
    return h_new, attn


# ---------------------------------------------------------------------------
# Kernels
# ---------------------------------------------------------------------------
def encoder_proj_kernel(sents_ref, w2_ref, b12_ref, out_ref):
    # Step-invariant: computed once per sentence, reused for every token.
    out_ref[...] = (jnp.dot(sents_ref[...], w2_ref[...],
                            preferred_element_type=jnp.float32) + b12_ref[...])


def rnn_decoder_step_kernel(
        embs_ref, sents_ref, enc_proj_ref, hidden_ref,
        w1_ref, v_ref, lin_we_ref, lin_wc_ref, lin_b_ref,
        w_ir_ref, w_iz_ref, w_in_ref, w_hr_ref, w_hz_ref, w_hn_ref,
        b_r_ref, b_z_ref, b_in_ref, b_hn_ref,
        pred_w_ref, pred_b_ref,
        logits_ref, newh_ref, attn_ref):
    h_new, attn = _recurrence_step(
        embs_ref[...], hidden_ref[...], sents_ref[...], enc_proj_ref[...],
        w1_ref[...], v_ref[...], lin_we_ref[...], lin_wc_ref[...], lin_b_ref[...],
        w_ir_ref[...], w_iz_ref[...], w_in_ref[...],
        w_hr_ref[...], w_hz_ref[...], w_hn_ref[...],
        b_r_ref[...], b_z_ref[...], b_in_ref[...], b_hn_ref[...])
    logits_ref[...] = (jnp.dot(h_new, pred_w_ref[...],
                               preferred_element_type=jnp.float32)
                       + pred_b_ref[...])
    newh_ref[...] = h_new          # aliased with hidden_ref (in-place update)
    attn_ref[...] = attn


def rnn_decoder_fused_kernel(
        embs_all_ref, sents_ref, enc_proj_ref, hidden0_ref,
        w1_ref, v_ref, lin_we_ref, lin_wc_ref, lin_b_ref,
        w_ir_ref, w_iz_ref, w_in_ref, w_hr_ref, w_hz_ref, w_hn_ref,
        b_r_ref, b_z_ref, b_in_ref, b_hn_ref,
        pred_w_ref, pred_b_ref,
        logits_all_ref, hfin_ref, attn_all_ref,
        h_all_ref):
    # Weights and encoder tensors are loaded once and stay resident across the
    # whole decode loop; only tiny per-step rows move.
    sents = sents_ref[...]
    enc_proj = enc_proj_ref[...]
    rec_weights = (w1_ref[...], v_ref[...], lin_we_ref[...], lin_wc_ref[...],
                   lin_b_ref[...],
                   w_ir_ref[...], w_iz_ref[...], w_in_ref[...],
                   w_hr_ref[...], w_hz_ref[...], w_hn_ref[...],
                   b_r_ref[...], b_z_ref[...], b_in_ref[...], b_hn_ref[...])
    num_steps = embs_all_ref.shape[0]

    def body(t, h):
        embs = embs_all_ref[pl.ds(t, 1), :]                          # (1, E)
        h_new, attn = _recurrence_step(embs, h, sents, enc_proj, *rec_weights)
        h_all_ref[pl.ds(t, 1), :] = h_new                            # (T, H) scratch
        # TODO(synk): lane-pad (or drop) this diagnostic (1, S) row at
        # production S for unmasked stores (review item).
        attn_all_ref[pl.ds(t, 1), :] = attn
        return h_new

    # Bounded unroll: the body is MXU/weight-drain bound, so full unrolling
    # only bloats code size and vreg live ranges (review item).
    h_final = jax.lax.fori_loop(0, num_steps, body, hidden0_ref[...], unroll=2)
    hfin_ref[...] = h_final

    # Vocab projection hoisted out of the loop (review item): one
    # (T, H) @ (H, Vpad) MXU matmul with M=T -- pred_w streams once, and the
    # logits store is a single lane/sublane-dense slab.
    # TODO(synk): at production V (~32k) tile pred_w over a vocab grid axis /
    # emit_pipeline with Buffered(2) (mandatory on v7x) and cast to bf16.
    logits_all_ref[...] = (
        jnp.dot(h_all_ref[...], pred_w_ref[...],
                preferred_element_type=jnp.float32) + pred_b_ref[...])


# ---------------------------------------------------------------------------
# Wrappers
# ---------------------------------------------------------------------------
def prepare_kernel_params(params):
    """One-time repack of torch-layout params into the kernel-friendly layout."""
    H = params["wih"].shape[0]
    V = params["pred_w"].shape[1]
    v_pad = pl.cdiv(V, _LANE) * _LANE
    wih, whh = params["wih"], params["whh"]
    bih, bhh = params["bih"][0], params["bhh"][0]
    return {
        "emb_table": params["emb_table"],
        "w1": params["w1"],
        "v": params["v"],
        "w2": params["w2"],
        "b12": params["b1"] + params["b2"],
        "lin_we": params["lin_we"],
        "lin_wc": params["lin_wc"],
        "lin_b": params["lin_b"],
        "w_ir": wih[:, :H], "w_iz": wih[:, H:2 * H], "w_in": wih[:, 2 * H:],
        "w_hr": whh[:, :H], "w_hz": whh[:, H:2 * H], "w_hn": whh[:, 2 * H:],
        "b_r": (bih[:H] + bhh[:H]).reshape(1, H),
        "b_z": (bih[H:2 * H] + bhh[H:2 * H]).reshape(1, H),
        "b_in": bih[2 * H:].reshape(1, H),
        "b_hn": bhh[2 * H:].reshape(1, H),
        "pred_w": jnp.pad(params["pred_w"], ((0, 0), (0, v_pad - V))),
        "pred_b": jnp.pad(params["pred_b"], ((0, 0), (0, v_pad - V))),
    }


def _weight_args(kp):
    return (kp["w1"], kp["v"], kp["lin_we"], kp["lin_wc"], kp["lin_b"],
            kp["w_ir"], kp["w_iz"], kp["w_in"],
            kp["w_hr"], kp["w_hz"], kp["w_hn"],
            kp["b_r"], kp["b_z"], kp["b_in"], kp["b_hn"],
            kp["pred_w"], kp["pred_b"])


def precompute_encoder_projection(kp, sents):
    """Step-invariant  sents @ W2 + b1 + b2 — run once per sentence."""
    S = sents.shape[0]
    A = kp["w2"].shape[1]
    return pl.pallas_call(
        encoder_proj_kernel,
        out_shape=jax.ShapeDtypeStruct((S, A), jnp.float32),
        in_specs=[_VMEM, _VMEM, _VMEM],
        out_specs=_VMEM,
        compiler_params=_compiler_params(sents, kp["w2"], kp["b12"]),
    )(sents, kp["w2"], kp["b12"])


def rnn_decoder_forward(kp, vocab_size, enc_proj, input_idx, sents, hidden):
    """Single decode step — mirrors RNNDecoder.forward(input_idx, sents, hidden)."""
    # TODO(synk): for true autoregressive generation move the embedding gather
    # and sampling in-kernel (weight-residency lever from the review).
    embs = kp["emb_table"][input_idx].reshape(1, -1)   # nn.Embedding gather (glue)
    hidden2d = hidden.reshape(1, -1)
    S = sents.shape[0]
    H = hidden2d.shape[-1]
    v_pad = kp["pred_w"].shape[-1]
    args = (embs, sents, enc_proj, hidden2d) + _weight_args(kp)

    logits, new_h, attn = pl.pallas_call(
        rnn_decoder_step_kernel,
        out_shape=(
            jax.ShapeDtypeStruct((1, v_pad), jnp.float32),
            jax.ShapeDtypeStruct((1, H), jnp.float32),
            jax.ShapeDtypeStruct((1, S), jnp.float32),
        ),
        in_specs=[_VMEM] * 21,
        out_specs=(_VMEM, _VMEM, _VMEM),
        input_output_aliases={3: 1},        # hidden -> new hidden (in place)
        compiler_params=_compiler_params(*args),
    )(*args)
    return logits[0, :vocab_size], new_h[0], attn[0]


def rnn_decoder_decode(kp, vocab_size, enc_proj, input_ids, sents, hidden):
    """Fused teacher-forced decode loop: one pallas_call for all steps."""
    embs_all = kp["emb_table"][input_ids]              # (T, E) gather (glue)
    hidden2d = hidden.reshape(1, -1)
    T = input_ids.shape[0]
    S = sents.shape[0]
    H = hidden2d.shape[-1]
    v_pad = kp["pred_w"].shape[-1]
    args = (embs_all, sents, enc_proj, hidden2d) + _weight_args(kp)
    scratch_bytes = T * H * 4 + T * (v_pad + S) * 4

    logits_all, h_fin, attn_all = pl.pallas_call(
        rnn_decoder_fused_kernel,
        out_shape=(
            jax.ShapeDtypeStruct((T, v_pad), jnp.float32),
            jax.ShapeDtypeStruct((1, H), jnp.float32),
            jax.ShapeDtypeStruct((T, S), jnp.float32),
        ),
        in_specs=[_VMEM] * 21,
        out_specs=(_VMEM, _VMEM, _VMEM),
        scratch_shapes=[pltpu.VMEM((T, H), jnp.float32)],   # all h_t for batched logits
        input_output_aliases={3: 1},
        compiler_params=_compiler_params(*args, scratch_bytes=scratch_bytes),
    )(*args)
    return logits_all[:, :vocab_size], h_fin[0], attn_all


# ---------------------------------------------------------------------------
# Pure-JAX references (torch-layout params)
# ---------------------------------------------------------------------------
def reference_forward(params, input_idx, sents, hidden):
    embs = params["emb_table"][input_idx].reshape(-1)
    p = jnp.tanh(hidden @ params["w1"] + params["b1"][0]
                 + sents @ params["w2"] + params["b2"][0])
    scores = p @ params["v"][0]
    attn = jax.nn.softmax(scores, axis=-1)
    weight_enc = attn @ sents
    cat = jnp.concatenate([embs, weight_enc])
    lin_w = jnp.concatenate([params["lin_we"], params["lin_wc"]], axis=0)
    x = jax.nn.relu(cat @ lin_w + params["lin_b"][0])
    H = hidden.shape[-1]
    gi = x @ params["wih"] + params["bih"][0]
    gh = hidden @ params["whh"] + params["bhh"][0]
    r = jax.nn.sigmoid(gi[:H] + gh[:H])
    z = jax.nn.sigmoid(gi[H:2 * H] + gh[H:2 * H])
    n = jnp.tanh(gi[2 * H:] + r * gh[2 * H:])
    h_new = (1.0 - z) * n + z * hidden
    logits = h_new @ params["pred_w"] + params["pred_b"][0]
    return logits, h_new, attn


def reference_decode(params, input_ids, sents, hidden):
    def step(h, idx):
        logits, h_new, attn = reference_forward(params, idx, sents, h)
        return h_new, (logits, attn)
    h_fin, (logits_all, attn_all) = jax.lax.scan(step, hidden, input_ids)
    return logits_all, h_fin, attn_all


def init_params(key, vocab_size, word_embedding, hidden_size, atten_dim, enc_dim):
    ks = jax.random.split(key, 16)
    scale = 0.1
    f32 = jnp.float32
    return {
        "emb_table": jax.random.normal(ks[0], (vocab_size, word_embedding), f32) * scale,
        "w1": jax.random.normal(ks[1], (hidden_size, atten_dim), f32) * scale,
        "b1": jax.random.normal(ks[2], (1, atten_dim), f32) * scale,
        "w2": jax.random.normal(ks[3], (enc_dim, atten_dim), f32) * scale,
        "b2": jax.random.normal(ks[4], (1, atten_dim), f32) * scale,
        "v": jax.random.normal(ks[5], (1, atten_dim), f32) * scale,
        "lin_we": jax.random.normal(ks[6], (word_embedding, hidden_size), f32) * scale,
        "lin_wc": jax.random.normal(ks[7], (enc_dim, hidden_size), f32) * scale,
        "lin_b": jax.random.normal(ks[8], (1, hidden_size), f32) * scale,
        "wih": jax.random.normal(ks[9], (hidden_size, 3 * hidden_size), f32) * scale,
        "bih": jax.random.normal(ks[10], (1, 3 * hidden_size), f32) * scale,
        "whh": jax.random.normal(ks[11], (hidden_size, 3 * hidden_size), f32) * scale,
        "bhh": jax.random.normal(ks[12], (1, 3 * hidden_size), f32) * scale,
        "pred_w": jax.random.normal(ks[13], (hidden_size, vocab_size), f32) * scale,
        "pred_b": jax.random.normal(ks[14], (1, vocab_size), f32) * scale,
    }


if __name__ == "__main__":
    vocab_size = 64
    word_embedding = 32
    hidden_size = 32
    atten_dim = 32
    enc_dim = 32
    seq_len = 8
    decode_steps = 4

    key = jax.random.PRNGKey(0)
    kparam_key, ks, kh = jax.random.split(key, 3)
    params = init_params(kparam_key, vocab_size, word_embedding, hidden_size,
                         atten_dim, enc_dim)
    kparams = prepare_kernel_params(params)

    input_idx = jnp.array(3, dtype=jnp.int32)
    sents = jax.random.normal(ks, (seq_len, enc_dim), jnp.float32)
    hidden = jax.random.normal(kh, (hidden_size,), jnp.float32)

    # Step-invariant encoder projection: computed once per sentence (hoisted).
    enc_proj = precompute_encoder_projection(kparams, sents)

    # --- single decode step (exact module semantics) -------------------------
    logits, new_h, attn = rnn_decoder_forward(
        kparams, vocab_size, enc_proj, input_idx, sents, hidden)
    jax.block_until_ready((logits, new_h, attn))

    ref_logits, ref_h, ref_attn = reference_forward(params, input_idx, sents, hidden)
    assert logits.shape == (vocab_size,)
    assert new_h.shape == (hidden_size,)
    assert attn.shape == (seq_len,)
    assert jnp.allclose(logits, ref_logits, atol=1e-5, rtol=1e-5)
    assert jnp.allclose(new_h, ref_h, atol=1e-5, rtol=1e-5)
    assert jnp.allclose(attn, ref_attn, atol=1e-5, rtol=1e-5)

    # --- fused multi-step decode (one launch, weights resident in VMEM,
    #     vocab projection batched over time) ---------------------------------
    input_ids = jnp.array([3, 7, 11, 1], dtype=jnp.int32)
    logits_all, h_fin, attn_all = rnn_decoder_decode(
        kparams, vocab_size, enc_proj, input_ids, sents, hidden)
    jax.block_until_ready((logits_all, h_fin, attn_all))

    ref_logits_all, ref_h_fin, ref_attn_all = reference_decode(
        params, input_ids, sents, hidden)
    assert logits_all.shape == (decode_steps, vocab_size)
    assert h_fin.shape == (hidden_size,)
    assert attn_all.shape == (decode_steps, seq_len)
    assert jnp.allclose(logits_all, ref_logits_all, atol=1e-5, rtol=1e-5)
    assert jnp.allclose(h_fin, ref_h_fin, atol=1e-5, rtol=1e-5)
    assert jnp.allclose(attn_all, ref_attn_all, atol=1e-5, rtol=1e-5)

    print("KERNEL_OK")
</pallas_src>

<mosaic_0001>
module attributes {stable_mosaic.version = 11 : i64} {
  func.func @encoder_proj_kernel(%arg0: memref<8x32xf32, #tpu.memory_space<vmem>>, %arg1: memref<32x32xf32, #tpu.memory_space<vmem>>, %arg2: memref<1x32xf32, #tpu.memory_space<vmem>>, %arg3: memref<8x32xf32, #tpu.memory_space<vmem>>) attributes {dimension_semantics = [], scalar_prefetch = 0 : i64, scratch_operands = 0 : i64, tpu.core_type = #tpu.core_type<tc>} {
    %c0 = arith.constant 0 : index
    %c0_0 = arith.constant 0 : index
    %0 = vector.load %arg0[%c0, %c0_0] : memref<8x32xf32, #tpu.memory_space<vmem>>, vector<8x32xf32>
    %c0_1 = arith.constant 0 : index
    %c0_2 = arith.constant 0 : index
    %1 = vector.load %arg1[%c0_1, %c0_2] : memref<32x32xf32, #tpu.memory_space<vmem>>, vector<32x32xf32>
    %cst = arith.constant dense<0.000000e+00> : vector<8x32xf32>
    %2 = tpu.matmul %0, %1, %cst {dimension_numbers = #tpu.dot_dimension_numbers<[1], [0], [0], [1], [0, 0, 1, 1], [], []>} : vector<8x32xf32>, vector<32x32xf32>, vector<8x32xf32> -> vector<8x32xf32>
    %c0_3 = arith.constant 0 : index
    %c0_4 = arith.constant 0 : index
    %3 = vector.load %arg2[%c0_3, %c0_4] : memref<1x32xf32, #tpu.memory_space<vmem>>, vector<1x32xf32>
    %4 = vector.broadcast %3 : vector<1x32xf32> to vector<8x32xf32>
    %5 = arith.addf %2, %4 : vector<8x32xf32>
    %c0_5 = arith.constant 0 : index
    %c0_6 = arith.constant 0 : index
    %6 = vector.load %arg3[%c0_5, %c0_6] : memref<8x32xf32, #tpu.memory_space<vmem>>, vector<8x32xf32>
    tpu.vector_store %arg3[%c0_5, %c0_6], %5 {strides = array<i32>} : memref<8x32xf32, #tpu.memory_space<vmem>>, vector<8x32xf32>,
    return
  }
}

</mosaic_0001>

<llo_original>
// kernel: tpu_custom_call.1
$region0: #{tpu_custom_call.1}
  #allocation0 [shape = 'u32[]', space=smem, size = 0x4, offset = 0x4, fixed_abs, tag = 'smem constant byte address 0x4 - core index']
  #allocation1 [shape = 'u32[144,128]{1,0:T(1,128)}', space=vmem, size = 0x12000, scoped, tag = 'internal scratch']
  %s0 = inlined_call_operand.hbm [shape: f32[8,32], index: 0, kind: input, shape index: {}]
  %s1 = inlined_call_operand.hbm [shape: f32[32,32], index: 1, kind: input, shape index: {}]
  %s2 = inlined_call_operand.vmem [shape: f32[1,32], index: 2, kind: input, shape index: {}]
  %s3 = inlined_call_operand.hbm [shape: f32[8,32], index: 3, kind: output, shape index: {}]
  %s4 = sld [smem:[#allocation0]]
  $region30: #{tpu_custom_call.1} parent=0
    _
  %s6 = ssub.s32 1, %s4
  %s7 = scalar_select 0, %s6, %s4
  $region1: #{tpu_custom_call.1} parent=0
    #allocation2 [shape = 'u8[4096]{0}', space=vmem, size = 0x1000, scoped, tag = 'input window, operand 0, single buffered']
    #allocation3 [shape = 's32[1]{0}', space=sflag, size = 0x4, scoped, tag = 'scoped memory for tpu_custom_call.1']
    #allocation4 [shape = 's32[1]{0}', space=sflag, size = 0x4, scoped, tag = 'scoped memory for tpu_custom_call.1']
    #allocation5 [shape = 'u8[16384]{0}', space=vmem, size = 0x4000, scoped, tag = 'input window, operand 1, single buffered']
    #allocation6 [shape = 's32[1]{0}', space=sflag, size = 0x4, scoped, tag = 'scoped memory for tpu_custom_call.1']
    #allocation7 [shape = 'u8[4096]{0}', space=vmem, size = 0x1000, scoped, tag = 'output window, operand 0, single buffered']
    %8 = vsyncpa [#allocation3], 0
    %9 = vsyncpa [#allocation6], 0
    %10 = vsyncpa [#allocation4], 0
    // Predicated region
    $region2: #{tpu_custom_call.1} parent=1 // pred_check
      _
    $region3: #{tpu_custom_call.1} parent=1 // pred_check_branch
      %12 = sbr.rel (0) target = $region5
    $region4: #{tpu_custom_call.1} parent=1 // pred_region
      %s14 = ssub.s32 128, 128
      %15 = vsyncadd [#allocation3], %s14
      %s17 = sshll.u32 [#allocation2], 4
      %s18 = int_to_ptr.vmem [resolvable:$true] %s17
      %20 = dma.hbm_to_vmem [thread:$0]  %s0, 128, %s18, [#allocation3]
    $region5: #{tpu_custom_call.1} parent=1 // pred_fallthru
      _
    // Predicated region
    $region6: #{tpu_custom_call.1} parent=1 // pred_check
      _
    $region7: #{tpu_custom_call.1} parent=1 // pred_check_branch
      %22 = sbr.rel (0) target = $region9
    $region8: #{tpu_custom_call.1} parent=1 // pred_region
      %s24 = ssub.s32 512, 512
      %25 = vsyncadd [#allocation6], %s24
      %s26 = sshll.u32 [#allocation5], 4
      %s27 = int_to_ptr.vmem [resolvable:$true] %s26
      %32 = dma.hbm_to_vmem [thread:$0]  %s1, 512, %s27, [#allocation6], 128, 128, 8
    $region9: #{tpu_custom_call.1} parent=1 // pred_fallthru
      _
    // Predicated region
    $region10: #{tpu_custom_call.1} parent=1 // pred_check
      _
    $region11: #{tpu_custom_call.1} parent=1 // pred_check_branch
      %34 = sbr.rel (0) target = $region13
    $region12: #{tpu_custom_call.1} parent=1 // pred_region
      _
    $region13: #{tpu_custom_call.1} parent=1 // pred_fallthru
      _
    // Predicated region
    $region14: #{tpu_custom_call.1} parent=1 // pred_check
      _
    $region15: #{tpu_custom_call.1} parent=1 // pred_check_branch
      %36 = sbr.rel (0) target = $region17
    $region16: #{tpu_custom_call.1} parent=1 // pred_region
      %37 = dma.done [#allocation3], 128
    $region17: #{tpu_custom_call.1} parent=1 // pred_fallthru
      _
    // Predicated region
    $region18: #{tpu_custom_call.1} parent=1 // pred_check
      _
    $region19: #{tpu_custom_call.1} parent=1 // pred_check_branch
      %39 = sbr.rel (0) target = $region21
    $region20: #{tpu_custom_call.1} parent=1 // pred_region
      %40 = dma.done [#allocation6], 512
    $region21: #{tpu_custom_call.1} parent=1 // pred_fallthru
      _
    %v41 = vld [vmem:[#allocation2] sm:$0xff]
    %v42 = vld [vmem:[#allocation5] sm:$0xff]
    %v43 = vld [vmem:[#allocation5 + $0x8] sm:$0xff]
    %v44 = vld [vmem:[#allocation5 + $0x10] sm:$0xff]
    %v45 = vld [vmem:[#allocation5 + $0x18] sm:$0xff]
    %v46 = vld [vmem:[%s2] sm:$0x1]
    %v48 = vlaneseq
    %v49 = vshrl.u32 %v48, 7
    %v50 = vsub.s32 0, %v49
    %v51 = vrot.slane %v46, %v50
    %vm53 = vcmask 261120
    %v55 = vsel %vm53, %v41, 0
    %57 = vmatprep.subr.mxu0 0.0
    %58 = vmatpush1.msra.mxu0 0.0
    %59 = vmatprep.subr.mxu0 0.0
    %60 = vmatpush1.msra.mxu0 0.0
    %61 = vmatprep.subr.mxu0 0.0
    %62 = vmatpush1.msra.mxu0 0.0
    %63 = vmatprep.subr.mxu0 0.0
    %64 = vmatpush1.msra.mxu0 0.0
    %65 = vmatprep.subr.mxu0 0.0
    %66 = vmatpush1.msra.mxu0 0.0
    %67 = vmatprep.subr.mxu0 0.0
    %68 = vmatpush1.msra.mxu0 0.0
    %69 = vmatprep.subr.mxu0 0.0
    %70 = vmatpush1.msra.mxu0 0.0
    %71 = vmatprep.subr.mxu0 0.0
    %72 = vmatpush1.msra.mxu0 0.0
    %73 = vmatprep.subr.mxu0 0.0
    %74 = vmatpush1.msra.mxu0 0.0
    %75 = vmatprep.subr.mxu0 0.0
    %76 = vmatpush1.msra.mxu0 0.0
    %77 = vmatprep.subr.mxu0 0.0
    %78 = vmatpush1.msra.mxu0 0.0
    %79 = vmatprep.subr.mxu0 0.0
    %80 = vmatpush1.msra.mxu0 0.0
    %81 = vmatprep.subr.mxu0 0.0
    %82 = vmatpush1.msra.mxu0 %v45
    %83 = vmatprep.subr.mxu0 0.0
    %84 = vmatpush1.msra.mxu0 %v44
    %85 = vmatprep.subr.mxu0 0.0
    %86 = vmatpush1.msra.mxu0 %v43
    %87 = vmatprep.subr.mxu0 0.0
    %88 = vmatpush1.msra.mxu0 %v42
    %89 = vmatprep.subr.mxu0 0.0
    %90 = vmatpush2.msra.mxu0 0.0
    %91 = vmatprep.subr.mxu0 0.0
    %92 = vmatpush2.msra.mxu0 0.0
    %93 = vmatprep.subr.mxu0 0.0
    %94 = vmatpush2.msra.mxu0 0.0
    %95 = vmatprep.subr.mxu0 0.0
    %96 = vmatpush2.msra.mxu0 0.0
    %97 = vmatprep.subr.mxu0 0.0
    %98 = vmatpush2.msra.mxu0 0.0
    %99 = vmatprep.subr.mxu0 0.0
    %100 = vmatpush2.msra.mxu0 0.0
    %101 = vmatprep.subr.mxu0 0.0
    %102 = vmatpush2.msra.mxu0 0.0
    %103 = vmatprep.subr.mxu0 0.0
    %104 = vmatpush2.msra.mxu0 0.0
    %105 = vmatprep.subr.mxu0 0.0
    %106 = vmatpush2.msra.mxu0 0.0
    %107 = vmatprep.subr.mxu0 0.0
    %108 = vmatpush2.msra.mxu0 0.0
    %109 = vmatprep.subr.mxu0 0.0
    %110 = vmatpush2.msra.mxu0 0.0
    %111 = vmatprep.subr.mxu0 0.0
    %112 = vmatpush2.msra.mxu0 0.0
    %113 = vmatprep.subr.mxu0 0.0
    %114 = vmatpush2.msra.mxu0 0.0
    %115 = vmatprep.subr.mxu0 0.0
    %116 = vmatpush2.msra.mxu0 0.0
    %117 = vmatprep.subr.mxu0 0.0
    %118 = vmatpush2.msra.mxu0 0.0
    %119 = vmatprep.subr.mxu0 0.0
    %120 = vmatpush2.msra.mxu0 0.0
    %121 = vmatprep.mubr.f32.mxu0 0.0
    %122 = vmatmul.mubr.f32.gmra.mxu0 %v55
    %v123 = vpop.f32.mrf.mxu0
    %v124 = vadd.f32 %v51, %v123
    %v125 = vpop.f32.mrf.mxu0
    %126 = vdwg.mxu0
    %127 = vst.msk [vmem:[#allocation7] sm:$0xff] %vm53, %v124
    // Predicated region
    $region22: #{tpu_custom_call.1} parent=1 // pred_check
      _
    $region23: #{tpu_custom_call.1} parent=1 // pred_check_branch
      %129 = sbr.rel (0) target = $region25
    $region24: #{tpu_custom_call.1} parent=1 // pred_region
      %s131 = ssub.s32 128, 128
      %132 = vsyncadd [#allocation4], %s131
      %s134 = sshll.u32 [#allocation7], 4
      %s135 = int_to_ptr.vmem [resolvable:$true] %s134
      %137 = dma.vmem_to_hbm [thread:$0]  %s135, 128, %s3, [#allocation4]
    $region25: #{tpu_custom_call.1} parent=1 // pred_fallthru
      _
    // Predicated region
    $region26: #{tpu_custom_call.1} parent=1 // pred_check
      _
    $region27: #{tpu_custom_call.1} parent=1 // pred_check_branch
      %139 = sbr.rel (0) target = $region29
    $region28: #{tpu_custom_call.1} parent=1 // pred_region
      %140 = dma.done [#allocation4], 128
    $region29: #{tpu_custom_call.1} parent=1 // pred_fallthru
      _
    %141 = vsyncpa [#allocation3], 1
    %142 = vsyncpa [#allocation6], 1
    %143 = vsyncpa [#allocation4], 1

</llo_original>
